<compile_context>
chip_gen: v7x
topology: tpu7x:2x2x1
jax: 0.10.0
libtpu: 0.0.40
codegen_flags: <defaults>
</compile_context>

<pallas_src>
import functools

import jax
import jax.numpy as jnp
from jax.experimental import pallas as pl
from jax.experimental.pallas import tpu as pltpu

_LANE = 128
_SUBLANE = 8


def _round_up(x, m):
    return ((x + m - 1) // m) * m


def _as_index(target):
    """Keep narrow integer targets as-is (less HBM traffic); widen in-kernel."""
    if jnp.issubdtype(target.dtype, jnp.integer) and target.dtype.itemsize <= 4:
        return target
    return target.astype(jnp.int32)


def _focal_weight(logpt_raw, logpt_scaled, gamma):
    """loss = -(1 - pt)**gamma * logpt_scaled with pt = exp(logpt_raw)."""
    g = float(gamma)
    if g == 0.0:
        return -logpt_scaled            # no exp needed at all when gamma == 0
    pt = jnp.exp(logpt_raw)             # pt uses the pre-alpha logpt (as in PyTorch)
    om = jnp.maximum(1.0 - pt, 0.0)     # clamp: pt can exceed 1 by a few ULPs
    if g == int(g) and 0 < int(g) <= 4:
        w = om
        for _ in range(int(g) - 1):     # common integer gammas avoid jnp.power
            w = w * om
    else:
        w = om ** g
    return -w * logpt_scaled


# --------------------------------------------------------------------------
# N-D path (NCHW-style): class axis handled with a per-class loop over dense
# (rows, lanes) slices; positions fill all 8 sublanes on the packed path.
# --------------------------------------------------------------------------
def _focal_nd_kernel(x_ref, t_ref, a_ref, o_ref, *, n_classes, gamma, use_alpha,
                     tile_rows, valid, mask_edge):
    # x_ref: (1, C, rows, lanes)   t_ref: (1, 1, rows, lanes)   a_ref: (C,) SMEM
    t = t_ref[0, 0, :, :].astype(jnp.int32)                       # (rows, lanes)

    # Running class max (pure VALU elementwise max between dense slices).
    x_max = x_ref[0, 0, :, :].astype(jnp.float32)
    for c in range(1, n_classes):
        x_max = jnp.maximum(x_max, x_ref[0, c, :, :].astype(jnp.float32))

    # Second pass: sum(exp), select target-class z and alpha via compares
    # against a static class index (no iota one-hot, no cross-sublane reduce).
    sum_exp = jnp.zeros_like(x_max)
    z_t = jnp.zeros_like(x_max)
    at = jnp.zeros_like(x_max) if use_alpha else None
    for c in range(n_classes):
        z = x_ref[0, c, :, :].astype(jnp.float32) - x_max
        sum_exp = sum_exp + jnp.exp(z)
        sel = t == c
        z_t = jnp.where(sel, z, z_t)
        if use_alpha:
            at = jnp.where(sel, a_ref[c], at)                     # scalar SMEM read

    logpt = z_t - jnp.log(sum_exp)                                # log-softmax at target
    logpt_s = logpt * at if use_alpha else logpt
    loss = _focal_weight(logpt, logpt_s, gamma)                   # (rows, lanes)

    # Per-tile partial sum; every (batch, tile) grid point owns its own block.
    o_ref[...] = jnp.broadcast_to(jnp.sum(loss), (1, 1, 1, _LANE))

    if mask_edge:
        j = pl.program_id(1)

        @pl.when(j == pl.num_programs(1) - 1)        # mask only on the last tile
        def _():
            rows, lanes = loss.shape
            if tile_rows:   # grid walks the sublane-row axis (packed layout)
                idx = j * rows + jax.lax.broadcasted_iota(
                    jnp.int32, (rows, lanes), 0)
            else:           # grid walks the lane axis (ragged layout)
                idx = j * lanes + jax.lax.broadcasted_iota(
                    jnp.int32, (rows, lanes), 1)
            masked = jnp.where(idx < valid, loss, 0.0)
            o_ref[...] = jnp.broadcast_to(jnp.sum(masked), (1, 1, 1, _LANE))


def _focal_loss_nd(x, tgt, alpha, gamma, use_alpha, slab_bytes):
    n, c, s = x.shape
    slab_elems = max(slab_bytes // 4, _SUBLANE * _LANE * c)

    if s % _LANE == 0:
        # Packed fast path: (N, C, S) -> (N, C, R, 128) is a free reshape.
        r = s // _LANE
        rows = max(_SUBLANE, (slab_elems // (c * _LANE)) // _SUBLANE * _SUBLANE)
        rows = min(rows, _round_up(r, _SUBLANE))
        if n == 1 and r > _SUBLANE and pl.cdiv(r, rows) == 1:
            rows = _round_up(pl.cdiv(r, 2), _SUBLANE)   # >= 2 steps for v7x dual-TC
        n_tiles = pl.cdiv(r, rows)
        mask_edge = (r % rows) != 0
        x4 = x.reshape(n, c, r, _LANE)
        t4 = tgt.reshape(n, 1, r, _LANE)
        block, tblock = (1, c, rows, _LANE), (1, 1, rows, _LANE)
        idx_map = lambda i, j: (i, 0, j, 0)
        tile_rows, valid = True, r
    else:
        # Ragged path: NO wrapper jnp.pad; the edge block's garbage lanes are
        # masked in-kernel (only on the last tile).
        lanes = max(_LANE, (slab_elems // c) // _LANE * _LANE)
        lanes = min(lanes, _round_up(s, _LANE))
        if n == 1 and s > _LANE and pl.cdiv(s, lanes) == 1:
            lanes = _round_up(pl.cdiv(s, 2), _LANE)
        n_tiles = pl.cdiv(s, lanes)
        mask_edge = (s % lanes) != 0
        x4 = x.reshape(n, c, 1, s)
        t4 = tgt.reshape(n, 1, 1, s)
        block, tblock = (1, c, 1, lanes), (1, 1, 1, lanes)
        idx_map = lambda i, j: (i, 0, 0, j)
        tile_rows, valid = False, s

    # NOTE: the per-class loop is unrolled; intended for segmentation-scale C.
    kernel = functools.partial(
        _focal_nd_kernel, n_classes=c, gamma=float(gamma), use_alpha=use_alpha,
        tile_rows=tile_rows, valid=valid, mask_edge=mask_edge)

    partials = pl.pallas_call(
        kernel,
        out_shape=jax.ShapeDtypeStruct((n, n_tiles, 1, _LANE), jnp.float32),
        grid_spec=pltpu.PrefetchScalarGridSpec(
            num_scalar_prefetch=0,
            grid=(n, n_tiles),
            in_specs=[
                pl.BlockSpec(block, idx_map),                      # logits slab
                pl.BlockSpec(tblock, idx_map),                     # targets
                pl.BlockSpec(memory_space=pltpu.MemorySpace.SMEM), # alpha (C,)
            ],
            out_specs=pl.BlockSpec((1, 1, 1, _LANE), lambda i, j: (i, j, 0, 0)),
        ),
        compiler_params=pltpu.CompilerParams(
            dimension_semantics=("parallel", "parallel"),
            vmem_limit_bytes=32 * 1024 * 1024),
    )(x4, t4, alpha)

    return jnp.sum(partials[:, :, 0, 0])


# --------------------------------------------------------------------------
# 2-D (N, C) classification path: classes live on lanes naturally, so no
# wrapper transpose (no extra HBM pass). Rows tiled on sublanes.
# --------------------------------------------------------------------------
def _focal_2d_kernel(x_ref, t_ref, a_ref, o_ref, *, gamma, use_alpha,
                     n_valid, mask_edge):
    x = x_ref[...].astype(jnp.float32)                             # (tn, C)
    t = t_ref[...].astype(jnp.int32)                               # (tn, 1)
    tn, c = x.shape

    x_max = jnp.max(x, axis=1, keepdims=True)
    z = x - x_max
    lse = jnp.log(jnp.sum(jnp.exp(z), axis=1, keepdims=True))
    sel = jax.lax.broadcasted_iota(jnp.int32, (tn, c), 1) == t
    z_t = jnp.sum(jnp.where(sel, z, 0.0), axis=1, keepdims=True)
    logpt = z_t - lse                                              # (tn, 1)
    if use_alpha:
        at = jnp.sum(jnp.where(sel, a_ref[...].astype(jnp.float32), 0.0),
                     axis=1, keepdims=True)
        logpt_s = logpt * at
    else:
        logpt_s = logpt
    loss = _focal_weight(logpt, logpt_s, gamma)                    # (tn, 1)

    o_ref[...] = jnp.broadcast_to(jnp.sum(loss), (1, 1, _LANE))

    if mask_edge:
        i = pl.program_id(0)

        @pl.when(i == pl.num_programs(0) - 1)
        def _():
            ridx = i * tn + jax.lax.broadcasted_iota(jnp.int32, (tn, 1), 0)
            o_ref[...] = jnp.broadcast_to(
                jnp.sum(jnp.where(ridx < n_valid, loss, 0.0)), (1, 1, _LANE))


def _focal_loss_2d(x, tgt, alpha, gamma, use_alpha, slab_bytes):
    n, c = x.shape
    lane_eff = _round_up(c, _LANE)
    if n <= _SUBLANE:
        tn = n                                    # full-dim block, no masking
    else:
        tn = max(_SUBLANE, ((slab_bytes // 4) // lane_eff) // _SUBLANE * _SUBLANE)
        tn = min(tn, _round_up(n, _SUBLANE))
        if pl.cdiv(n, tn) == 1 and n > _SUBLANE:
            tn = _round_up(pl.cdiv(n, 2), _SUBLANE)   # >= 2 steps for v7x dual-TC
    n_tiles = pl.cdiv(n, tn)
    mask_edge = (n % tn) != 0

    kernel = functools.partial(
        _focal_2d_kernel, gamma=float(gamma), use_alpha=use_alpha,
        n_valid=n, mask_edge=mask_edge)

    partials = pl.pallas_call(
        kernel,
        out_shape=jax.ShapeDtypeStruct((n_tiles, 1, _LANE), jnp.float32),
        grid_spec=pltpu.PrefetchScalarGridSpec(
            num_scalar_prefetch=0,
            grid=(n_tiles,),
            in_specs=[
                pl.BlockSpec((tn, c), lambda i: (i, 0)),
                pl.BlockSpec((tn, 1), lambda i: (i, 0)),
                pl.BlockSpec((1, c), lambda i: (0, 0)),    # alpha, VMEM-resident
            ],
            out_specs=pl.BlockSpec((1, 1, _LANE), lambda i: (i, 0, 0)),
        ),
        compiler_params=pltpu.CompilerParams(
            dimension_semantics=("parallel",),
            vmem_limit_bytes=32 * 1024 * 1024),
    )(x, tgt, alpha)

    return jnp.sum(partials[:, 0, 0])


# --------------------------------------------------------------------------
# Public wrapper (matches FocalLoss.forward semantics).
# --------------------------------------------------------------------------
def focal_loss(logits, target, gamma=0.0, alpha=None, size_average=True,
               slab_bytes=2 << 20):
    use_alpha = alpha is not None

    if logits.ndim > 2:
        n, c = logits.shape[0], logits.shape[1]
        s = 1
        for d in logits.shape[2:]:
            s *= d
        x = logits.reshape(n, c, s)                    # NCHW...: C already on dim 1
        tgt = _as_index(target).reshape(n, 1, s)
        a = (jnp.asarray(alpha, jnp.float32).reshape(c) if use_alpha
             else jnp.ones((c,), jnp.float32))
        total = _focal_loss_nd(x, tgt, a, gamma, use_alpha, slab_bytes)
        m = n * s
    else:
        n, c = logits.shape
        tgt = _as_index(target).reshape(n, 1)
        a = (jnp.asarray(alpha, jnp.float32).reshape(1, c) if use_alpha
             else jnp.ones((1, c), jnp.float32))
        total = _focal_loss_2d(logits, tgt, a, gamma, use_alpha, slab_bytes)
        m = n

    if size_average:
        return total / jnp.float32(m)
    return total


def _focal_loss_ref(logits, target, gamma=0.0, alpha=None, size_average=True):
    """Pure-JAX reference for validation."""
    if logits.ndim > 2:
        c = logits.shape[1]
        perm = (0,) + tuple(range(2, logits.ndim)) + (1,)
        flat = jnp.transpose(logits, perm).reshape(-1, c)
    else:
        flat = logits
    t = target.reshape(-1)
    logp = jax.nn.log_softmax(flat.astype(jnp.float32), axis=1)
    logpt = jnp.take_along_axis(logp, t[:, None], axis=1)[:, 0]
    pt = jnp.exp(logpt)
    if alpha is not None:
        at = jnp.asarray(alpha, dtype=jnp.float32)[t]
        logpt = logpt * at
    loss = -((1.0 - pt) ** gamma) * logpt
    return loss.mean() if size_average else loss.sum()


if __name__ == "__main__":
    key = jax.random.PRNGKey(0)
    k1, k2, k3, k4 = jax.random.split(key, 4)

    # Segmentation-style 4D input (N, C, H, W): S = 256 -> packed fast path.
    N, C, H, W = 2, 4, 16, 16
    logits = jax.random.normal(k1, (N, C, H, W), dtype=jnp.float32)
    target = jax.random.randint(k2, (N, H, W), 0, C, dtype=jnp.int32)

    gamma = 2.0
    alpha = jnp.array([0.25, 0.75, 0.5, 0.25], dtype=jnp.float32)

    out = jax.block_until_ready(
        focal_loss(logits, target, gamma=gamma, alpha=alpha, size_average=True))
    ref = _focal_loss_ref(logits, target, gamma=gamma, alpha=alpha,
                          size_average=True)
    assert jnp.allclose(out, ref, atol=1e-5, rtol=1e-5), (out, ref)

    # Default configuration (gamma=0, no alpha, mean).
    out0 = jax.block_until_ready(focal_loss(logits, target))
    ref0 = _focal_loss_ref(logits, target)
    assert jnp.allclose(out0, ref0, atol=1e-5, rtol=1e-5), (out0, ref0)

    # Ragged spatial extent (S = 195, not a multiple of 128) -> edge-block
    # masking path (no wrapper pad), non-integer gamma, sum reduction.
    H2, W2 = 15, 13
    logits2 = jax.random.normal(k3, (N, C, H2, W2), dtype=jnp.float32)
    target2 = jax.random.randint(k4, (N, H2, W2), 0, C, dtype=jnp.int32)
    out2 = jax.block_until_ready(
        focal_loss(logits2, target2, gamma=1.5, alpha=alpha,
                   size_average=False))
    ref2 = _focal_loss_ref(logits2, target2, gamma=1.5, alpha=alpha,
                           size_average=False)
    assert jnp.allclose(out2, ref2, atol=1e-4, rtol=1e-5), (out2, ref2)

    # Plain 2-D classification input (N, C) -> lanes-major kernel (no transpose).
    logits3 = jax.random.normal(k1, (8, 5), dtype=jnp.float32)
    target3 = jax.random.randint(k2, (8,), 0, 5, dtype=jnp.int32)
    out3 = jax.block_until_ready(focal_loss(logits3, target3, gamma=2.0))
    ref3 = _focal_loss_ref(logits3, target3, gamma=2.0)
    assert jnp.allclose(out3, ref3, atol=1e-5, rtol=1e-5), (out3, ref3)

    # 2-D path with alpha as well.
    out4 = jax.block_until_ready(
        focal_loss(logits3, target3, gamma=1.0,
                   alpha=jnp.array([0.1, 0.2, 0.3, 0.2, 0.2], jnp.float32)))
    ref4 = _focal_loss_ref(logits3, target3, gamma=1.0,
                           alpha=jnp.array([0.1, 0.2, 0.3, 0.2, 0.2], jnp.float32))
    assert jnp.allclose(out4, ref4, atol=1e-5, rtol=1e-5), (out4, ref4)

    print("KERNEL_OK")
</pallas_src>

<mosaic_0001>
module attributes {stable_mosaic.version = 11 : i64} {
  func.func @_focal_nd_kernel(%arg0: i32, %arg1: i32, %arg2: memref<1x4x8x128xf32, #tpu.memory_space<vmem>>, %arg3: memref<1x1x8x128xi32, #tpu.memory_space<vmem>>, %arg4: memref<4xf32, #tpu.memory_space<smem>>, %arg5: memref<1x1x1x128xf32, #tpu.memory_space<vmem>>) attributes {dimension_semantics = [#tpu.dimension_semantics<parallel>, #tpu.dimension_semantics<parallel>], iteration_bounds = array<i64: 2, 1>, scalar_prefetch = 0 : i64, scratch_operands = 0 : i64, tpu.core_type = #tpu.core_type<tc>, window_params = [{transform_indices = @transform_0, window_bounds = array<i64: 1, 4, 8, 128>}, {transform_indices = @transform_1, window_bounds = array<i64: 1, 1, 8, 128>}, {transform_indices = @transform_2, window_bounds = array<i64: 4>}, {transform_indices = @transform_3, window_bounds = array<i64: 1, 1, 1, 128>}]} {
    %c0 = arith.constant 0 : index
    %c0_0 = arith.constant 0 : index
    %c0_1 = arith.constant 0 : index
    %c0_2 = arith.constant 0 : index
    %0 = vector.load %arg3[%c0, %c0_0, %c0_1, %c0_2] : memref<1x1x8x128xi32, #tpu.memory_space<vmem>>, vector<1x1x8x128xi32>
    %1 = vector.shape_cast %0 : vector<1x1x8x128xi32> to vector<8x128xi32>
    %c0_3 = arith.constant 0 : index
    %c0_4 = arith.constant 0 : index
    %c0_5 = arith.constant 0 : index
    %c0_6 = arith.constant 0 : index
    %2 = vector.load %arg2[%c0_3, %c0_4, %c0_5, %c0_6] : memref<1x4x8x128xf32, #tpu.memory_space<vmem>>, vector<1x1x8x128xf32>
    %3 = vector.shape_cast %2 : vector<1x1x8x128xf32> to vector<8x128xf32>
    %c0_7 = arith.constant 0 : index
    %c1 = arith.constant 1 : index
    %c0_8 = arith.constant 0 : index
    %c0_9 = arith.constant 0 : index
    %4 = vector.load %arg2[%c0_7, %c1, %c0_8, %c0_9] : memref<1x4x8x128xf32, #tpu.memory_space<vmem>>, vector<1x1x8x128xf32>
    %5 = vector.shape_cast %4 : vector<1x1x8x128xf32> to vector<8x128xf32>
    %6 = arith.maximumf %3, %5 : vector<8x128xf32>
    %c0_10 = arith.constant 0 : index
    %c2 = arith.constant 2 : index
    %c0_11 = arith.constant 0 : index
    %c0_12 = arith.constant 0 : index
    %7 = vector.load %arg2[%c0_10, %c2, %c0_11, %c0_12] : memref<1x4x8x128xf32, #tpu.memory_space<vmem>>, vector<1x1x8x128xf32>
    %8 = vector.shape_cast %7 : vector<1x1x8x128xf32> to vector<8x128xf32>
    %9 = arith.maximumf %6, %8 : vector<8x128xf32>
    %c0_13 = arith.constant 0 : index
    %c3 = arith.constant 3 : index
    %c0_14 = arith.constant 0 : index
    %c0_15 = arith.constant 0 : index
    %10 = vector.load %arg2[%c0_13, %c3, %c0_14, %c0_15] : memref<1x4x8x128xf32, #tpu.memory_space<vmem>>, vector<1x1x8x128xf32>
    %11 = vector.shape_cast %10 : vector<1x1x8x128xf32> to vector<8x128xf32>
    %12 = arith.maximumf %9, %11 : vector<8x128xf32>
    %cst = arith.constant 0.000000e+00 : f32
    %13 = vector.broadcast %cst : f32 to vector<8x128xf32>
    %cst_16 = arith.constant 0.000000e+00 : f32
    %14 = vector.broadcast %cst_16 : f32 to vector<8x128xf32>
    %cst_17 = arith.constant 0.000000e+00 : f32
    %15 = vector.broadcast %cst_17 : f32 to vector<8x128xf32>
    %c0_18 = arith.constant 0 : index
    %c0_19 = arith.constant 0 : index
    %c0_20 = arith.constant 0 : index
    %c0_21 = arith.constant 0 : index
    %16 = vector.load %arg2[%c0_18, %c0_19, %c0_20, %c0_21] : memref<1x4x8x128xf32, #tpu.memory_space<vmem>>, vector<1x1x8x128xf32>
    %17 = vector.shape_cast %16 : vector<1x1x8x128xf32> to vector<8x128xf32>
    %18 = arith.subf %17, %12 : vector<8x128xf32>
    %19 = math.exp %18 : vector<8x128xf32>
    %20 = arith.addf %13, %19 : vector<8x128xf32>
    %c0_i32 = arith.constant 0 : i32
    %21 = vector.broadcast %c0_i32 : i32 to vector<8x128xi32>
    %22 = arith.cmpi eq, %1, %21 : vector<8x128xi32>
    %23 = arith.select %22, %18, %14 : vector<8x128xi1>, vector<8x128xf32>
    %c0_22 = arith.constant 0 : index
    %24 = memref.load %arg4[%c0_22] : memref<4xf32, #tpu.memory_space<smem>>
    %25 = vector.broadcast %24 : f32 to vector<8x128xf32>
    %26 = arith.select %22, %25, %15 : vector<8x128xi1>, vector<8x128xf32>
    %c0_23 = arith.constant 0 : index
    %c1_24 = arith.constant 1 : index
    %c0_25 = arith.constant 0 : index
    %c0_26 = arith.constant 0 : index
    %27 = vector.load %arg2[%c0_23, %c1_24, %c0_25, %c0_26] : memref<1x4x8x128xf32, #tpu.memory_space<vmem>>, vector<1x1x8x128xf32>
    %28 = vector.shape_cast %27 : vector<1x1x8x128xf32> to vector<8x128xf32>
    %29 = arith.subf %28, %12 : vector<8x128xf32>
    %30 = math.exp %29 : vector<8x128xf32>
    %31 = arith.addf %20, %30 : vector<8x128xf32>
    %c1_i32 = arith.constant 1 : i32
    %32 = vector.broadcast %c1_i32 : i32 to vector<8x128xi32>
    %33 = arith.cmpi eq, %1, %32 : vector<8x128xi32>
    %34 = arith.select %33, %29, %23 : vector<8x128xi1>, vector<8x128xf32>
    %c1_27 = arith.constant 1 : index
    %35 = memref.load %arg4[%c1_27] : memref<4xf32, #tpu.memory_space<smem>>
    %36 = vector.broadcast %35 : f32 to vector<8x128xf32>
    %37 = arith.select %33, %36, %26 : vector<8x128xi1>, vector<8x128xf32>
    %c0_28 = arith.constant 0 : index
    %c2_29 = arith.constant 2 : index
    %c0_30 = arith.constant 0 : index
    %c0_31 = arith.constant 0 : index
    %38 = vector.load %arg2[%c0_28, %c2_29, %c0_30, %c0_31] : memref<1x4x8x128xf32, #tpu.memory_space<vmem>>, vector<1x1x8x128xf32>
    %39 = vector.shape_cast %38 : vector<1x1x8x128xf32> to vector<8x128xf32>
    %40 = arith.subf %39, %12 : vector<8x128xf32>
    %41 = math.exp %40 : vector<8x128xf32>
    %42 = arith.addf %31, %41 : vector<8x128xf32>
    %c2_i32 = arith.constant 2 : i32
    %43 = vector.broadcast %c2_i32 : i32 to vector<8x128xi32>
    %44 = arith.cmpi eq, %1, %43 : vector<8x128xi32>
    %45 = arith.select %44, %40, %34 : vector<8x128xi1>, vector<8x128xf32>
    %c2_32 = arith.constant 2 : index
    %46 = memref.load %arg4[%c2_32] : memref<4xf32, #tpu.memory_space<smem>>
    %47 = vector.broadcast %46 : f32 to vector<8x128xf32>
    %48 = arith.select %44, %47, %37 : vector<8x128xi1>, vector<8x128xf32>
    %c0_33 = arith.constant 0 : index
    %c3_34 = arith.constant 3 : index
    %c0_35 = arith.constant 0 : index
    %c0_36 = arith.constant 0 : index
    %49 = vector.load %arg2[%c0_33, %c3_34, %c0_35, %c0_36] : memref<1x4x8x128xf32, #tpu.memory_space<vmem>>, vector<1x1x8x128xf32>
    %50 = vector.shape_cast %49 : vector<1x1x8x128xf32> to vector<8x128xf32>
    %51 = arith.subf %50, %12 : vector<8x128xf32>
    %52 = math.exp %51 : vector<8x128xf32>
    %53 = arith.addf %42, %52 : vector<8x128xf32>
    %c3_i32 = arith.constant 3 : i32
    %54 = vector.broadcast %c3_i32 : i32 to vector<8x128xi32>
    %55 = arith.cmpi eq, %1, %54 : vector<8x128xi32>
    %56 = arith.select %55, %51, %45 : vector<8x128xi1>, vector<8x128xf32>
    %c3_37 = arith.constant 3 : index
    %57 = memref.load %arg4[%c3_37] : memref<4xf32, #tpu.memory_space<smem>>
    %58 = vector.broadcast %57 : f32 to vector<8x128xf32>
    %59 = arith.select %55, %58, %48 : vector<8x128xi1>, vector<8x128xf32>
    %60 = math.log %53 : vector<8x128xf32>
    %61 = arith.subf %56, %60 : vector<8x128xf32>
    %62 = arith.mulf %61, %59 : vector<8x128xf32>
    %63 = math.exp %61 : vector<8x128xf32>
    %cst_38 = arith.constant 1.000000e+00 : f32
    %64 = vector.broadcast %cst_38 : f32 to vector<8x128xf32>
    %65 = arith.subf %64, %63 : vector<8x128xf32>
    %cst_39 = arith.constant 0.000000e+00 : f32
    %66 = vector.broadcast %cst_39 : f32 to vector<8x128xf32>
    %67 = arith.maximumf %65, %66 : vector<8x128xf32>
    %68 = arith.mulf %67, %67 : vector<8x128xf32>
    %cst_40 = arith.constant 0.000000e+00 : f32
    %69 = vector.broadcast %cst_40 : f32 to vector<8x128xf32>
    %70 = arith.subf %69, %68 : vector<8x128xf32>
    %71 = arith.mulf %70, %62 : vector<8x128xf32>
    %72 = vector.shape_cast %71 : vector<8x128xf32> to vector<1x8x128xf32>
    %cst_41 = arith.constant dense<0.000000e+00> : vector<1xf32>
    %73 = vector.multi_reduction <add>, %72, %cst_41 [1, 2] : vector<1x8x128xf32> to vector<1xf32>
    %74 = vector.shape_cast %73 : vector<1xf32> to vector<1x1x1xf32>
    %75 = vector.extract %74[0, 0, 0] : f32 from vector<1x1x1xf32>
    %76 = vector.broadcast %75 : f32 to vector<1x1x1x128xf32>
    %c0_42 = arith.constant 0 : index
    %c0_43 = arith.constant 0 : index
    %c0_44 = arith.constant 0 : index
    %c0_45 = arith.constant 0 : index
    %77 = vector.load %arg5[%c0_42, %c0_43, %c0_44, %c0_45] : memref<1x1x1x128xf32, #tpu.memory_space<vmem>>, vector<1x1x1x128xf32>
    tpu.vector_store %arg5[%c0_42, %c0_43, %c0_44, %c0_45], %76 {strides = array<i32>} : memref<1x1x1x128xf32, #tpu.memory_space<vmem>>, vector<1x1x1x128xf32>,
    %c0_i32_46 = arith.constant 0 : i32
    %78 = arith.cmpi eq, %arg1, %c0_i32_46 : i32
    %79 = arith.extui %78 : i1 to i32
    %c0_i32_47 = arith.constant 0 : i32
    %80 = arith.cmpi ne, %79, %c0_i32_47 : i32
    scf.if %80 {
      %c8_i32 = arith.constant 8 : i32
      %81 = arith.muli %arg1, %c8_i32 : i32
      %82 = tpu.iota {dimensions = array<i32: 0>} : vector<8x128xi32>
      %83 = vector.broadcast %81 : i32 to vector<8x128xi32>
      %84 = arith.addi %83, %82 : vector<8x128xi32>
      %c2_i32_48 = arith.constant 2 : i32
      %85 = vector.broadcast %c2_i32_48 : i32 to vector<8x128xi32>
      %86 = arith.cmpi slt, %84, %85 : vector<8x128xi32>
      %cst_49 = arith.constant 0.000000e+00 : f32
      %87 = vector.broadcast %cst_49 : f32 to vector<8x128xf32>
      %88 = arith.select %86, %71, %87 : vector<8x128xi1>, vector<8x128xf32>
      %89 = vector.shape_cast %88 : vector<8x128xf32> to vector<1x8x128xf32>
      %cst_50 = arith.constant dense<0.000000e+00> : vector<1xf32>
      %90 = vector.multi_reduction <add>, %89, %cst_50 [1, 2] : vector<1x8x128xf32> to vector<1xf32>
      %91 = vector.shape_cast %90 : vector<1xf32> to vector<1x1x1xf32>
      %92 = vector.extract %91[0, 0, 0] : f32 from vector<1x1x1xf32>
      %93 = vector.broadcast %92 : f32 to vector<1x1x1x128xf32>
      %c0_51 = arith.constant 0 : index
      %c0_52 = arith.constant 0 : index
      %c0_53 = arith.constant 0 : index
      %c0_54 = arith.constant 0 : index
      %94 = vector.load %arg5[%c0_51, %c0_52, %c0_53, %c0_54] : memref<1x1x1x128xf32, #tpu.memory_space<vmem>>, vector<1x1x1x128xf32>
      tpu.vector_store %arg5[%c0_51, %c0_52, %c0_53, %c0_54], %93 {strides = array<i32>} : memref<1x1x1x128xf32, #tpu.memory_space<vmem>>, vector<1x1x1x128xf32>,
    } else {
    }
    return
  }
  func.func @transform_0(%arg0: i32, %arg1: i32) -> (i32, i32, i32, i32) {
    %c0_i32 = arith.constant 0 : i32
    %c0_i32_0 = arith.constant 0 : i32
    %c0_i32_1 = arith.constant 0 : i32
    return %arg0, %c0_i32, %arg1, %c0_i32_0 : i32, i32, i32, i32
  }
  func.func @transform_1(%arg0: i32, %arg1: i32) -> (i32, i32, i32, i32) {
    %c0_i32 = arith.constant 0 : i32
    %c0_i32_0 = arith.constant 0 : i32
    %c0_i32_1 = arith.constant 0 : i32
    return %arg0, %c0_i32, %arg1, %c0_i32_0 : i32, i32, i32, i32
  }
  func.func @transform_2(%arg0: i32, %arg1: i32) -> i32 {
    %c0_i32 = arith.constant 0 : i32
    %c0_i32_0 = arith.constant 0 : i32
    return %c0_i32 : i32
  }
  func.func @transform_3(%arg0: i32, %arg1: i32) -> (i32, i32, i32, i32) {
    %c0_i32 = arith.constant 0 : i32
    %c0_i32_0 = arith.constant 0 : i32
    %c0_i32_1 = arith.constant 0 : i32
    return %arg0, %arg1, %c0_i32, %c0_i32_0 : i32, i32, i32, i32
  }
}

</mosaic_0001>

<llo_original>
// kernel: tpu_custom_call.1
$region0: #{tpu_custom_call.1}
  #allocation0 [shape = 'u32[]', space=smem, size = 0x4, offset = 0x4, fixed_abs, tag = 'smem constant byte address 0x4 - core index']
  #allocation1 [shape = 'u32[144,128]{1,0:T(1,128)}', space=vmem, size = 0x12000, scoped, tag = 'internal scratch']
  #allocation10 [shape = 's32[]', space=sflag, size = 0x4, offset = 0, fixed_abs, tag = 'sflag constant byte address 0x0 - dummy sync flag']
  %s0 = inlined_call_operand.hbm [shape: f32[2,4,2,128], index: 0, kind: input, shape index: {}]
  %s1 = inlined_call_operand.hbm [shape: s32[2,1,2,128], index: 1, kind: input, shape index: {}]
  %s2 = inlined_call_operand.vmem [shape: f32[4], index: 2, kind: input, shape index: {}]
  %s3 = inlined_call_operand.hbm [shape: f32[2,1,1,128], index: 3, kind: output, shape index: {}]
  %s4 = sld [smem:[#allocation0]]
  $region61: #{tpu_custom_call.1} parent=0
    _
  %s6 = ssub.s32 1, %s4
  %s7 = scalar_select 0, %s6, %s4
  $region1: #{tpu_custom_call.1} parent=0
    #allocation2 [shape = 'u8[32768]{0}', space=vmem, size = 0x8000, scoped, tag = 'input window, operand 0']
    #allocation3 [shape = 's32[2]{0}', space=sflag, size = 0x8, scoped, tag = 'scoped memory for tpu_custom_call.1']
    #allocation4 [shape = 's32[2]{0}', space=sflag, size = 0x8, scoped, tag = 'scoped memory for tpu_custom_call.1']
    #allocation5 [shape = 's32[2]{0}', space=sflag, size = 0x8, scoped, tag = 'scoped memory for tpu_custom_call.1']
    #allocation6 [shape = 'u8[8192]{0}', space=vmem, size = 0x2000, scoped, tag = 'input window, operand 1']
    #allocation7 [shape = 's32[2]{0}', space=sflag, size = 0x8, scoped, tag = 'scoped memory for tpu_custom_call.1']
    #allocation8 [shape = 'u8[512]{0}', space=smem, size = 0x200, scoped, tag = 'input window, operand 2, single buffered']
    #allocation9 [shape = 'u8[1024]{0}', space=vmem, size = 0x400, scoped, tag = 'output window, operand 0']
    %8 = vsyncpa [#allocation3], 0
    %s9 = scalar_lea.sflag [#allocation3], 1
    %10 = vsyncpa %s9, 0
    %11 = vsyncpa [#allocation7], 0
    %s12 = scalar_lea.sflag [#allocation7], 1
    %13 = vsyncpa %s12, 0
    %14 = vsyncpa [#allocation5], 0
    %15 = vsyncpa [#allocation4], 0
    %s16 = scalar_lea.sflag [#allocation4], 1
    %17 = vsyncpa %s16, 0
    loop: start=0, step=1, limit=4
    $region2: #{tpu_custom_call.1} parent=1 // loop_pre_header
      _
    $region3: #{tpu_custom_call.1} parent=1 // loop_header
      %s19 = sphi 0, %s23
      %p20 = scmp.ge.s32.totalorder %s19, 4
      %s26 = sphi 0, %s38
      %s27 = sphi 0, %s34
      %s28 = sphi 0, %s26
      %s29 = sphi 0, %s27
      %s30 = sphi 0, %s28
      %s31 = sphi 0, %s29
      %s43 = sphi 0, %s45
      %s46 = sphi 0, %s43
      %s47 = sphi 0, %s46
      %s63 = sphi 0, %s47
      %s71 = sphi 0, %s73
      %s74 = sphi 0, %s71
      %s75 = sphi 0, %s74
      %s91 = sphi 0, %s75
      %s95 = sphi 0, %s95
      %s97 = sphi 0, %s95
      %s98 = sphi 0, %s97
      %s112 = sphi 0, %s98
      %s120 = sphi 0, %s122
      %s123 = sphi 0, %s120
      %s124 = sphi 0, %s123
      %s140 = sphi 0, %s124
    $region4: #{tpu_custom_call.1} parent=1 // loop_header_branch
      %22 = sbr.rel (%p20) target = $region8
    $region5: #{tpu_custom_call.1} parent=1 // loop_body
      %s24 = ssub.s32 %s19, 1
      %s25 = ssub.s32 %s19, 2
      %s32 = sadd.s32 1, %s27
      %p33 = scmp.ge.s32.totalorder %s32, 1
      %s34 = scalar_select %p33, 0, %s32
      %s35 = sadd.s32 1, %s26
      %s36 = scalar_select %p33, %s35, %s26
      %p37 = scmp.ge.s32.totalorder %s36, 2
      %s38 = scalar_select %p37, 0, %s36
      %s39 = ssub.s32 %s26, %s38
      %s40 = ssub.s32 %s27, %s34
      %s41 = sor.u32 %s39, %s40
      %p42 = scmp.eq.s32.totalorder %s41, 0
      %s44 = sadd.s32 %s43, 1
      %s45 = scalar_select %p42, %s43, %s44
      %p48 = pneg %p42
      %p49 = scmp.eq.s32.totalorder %s19, 1
      %p50 = por %p48, %p49
      %p51 = scmp.ne.s32.totalorder %s43, %s46
      %p52 = scmp.eq.s32.totalorder %s19, 0
      %p53 = por %p51, %p52
      %p54 = scmp.ne.s32.totalorder %s43, %s46
      %p55 = scmp.eq.s32.totalorder %s24, 1
      %p56 = por %p54, %p55
      %p57 = scmp.ne.s32.totalorder %s46, %s47
      %p58 = scmp.eq.s32.totalorder %s24, 0
      %p59 = por %p57, %p58
      %p60 = scmp.ne.s32.totalorder %s46, %s47
      %p61 = scmp.eq.s32.totalorder %s25, 1
      %p62 = por %p60, %p61
      %p64 = scmp.ne.s32.totalorder %s47, %s63
      %p65 = scmp.eq.s32.totalorder %s25, 0
      %p66 = por %p64, %p65
      %s67 = ssub.s32 %s26, %s38
      %s68 = ssub.s32 %s27, %s34
      %s69 = sor.u32 %s67, %s68
      %p70 = scmp.eq.s32.totalorder %s69, 0
      %s72 = sadd.s32 %s71, 1
      %s73 = scalar_select %p70, %s71, %s72
      %p76 = pneg %p70
      %p77 = scmp.eq.s32.totalorder %s19, 1
      %p78 = por %p76, %p77
      %p79 = scmp.ne.s32.totalorder %s71, %s74
      %p80 = scmp.eq.s32.totalorder %s19, 0
      %p81 = por %p79, %p80
      %p82 = scmp.ne.s32.totalorder %s71, %s74
      %p83 = scmp.eq.s32.totalorder %s24, 1
      %p84 = por %p82, %p83
      %p85 = scmp.ne.s32.totalorder %s74, %s75
      %p86 = scmp.eq.s32.totalorder %s24, 0
      %p87 = por %p85, %p86
      %p88 = scmp.ne.s32.totalorder %s74, %s75
      %p89 = scmp.eq.s32.totalorder %s25, 1
      %p90 = por %p88, %p89
      %p92 = scmp.ne.s32.totalorder %s75, %s91
      %p93 = scmp.eq.s32.totalorder %s25, 0
      %p94 = por %p92, %p93
      %s96 = sadd.s32 %s95, 1
      %p99 = scmp.eq.s32.totalorder %s19, 1
      %p100 = scmp.ne.s32.totalorder %s95, %s97
      %p101 = scmp.eq.s32.totalorder %s19, 0
      %p102 = por %p100, %p101
      %p103 = scmp.ne.s32.totalorder %s95, %s97
      %p104 = scmp.eq.s32.totalorder %s24, 1
      %p105 = por %p103, %p104
      %p106 = scmp.ne.s32.totalorder %s97, %s98
      %p107 = scmp.eq.s32.totalorder %s24, 0
      %p108 = por %p106, %p107
      %p109 = scmp.ne.s32.totalorder %s97, %s98
      %p110 = scmp.eq.s32.totalorder %s25, 1
      %p111 = por %p109, %p110
      %p113 = scmp.ne.s32.totalorder %s98, %s112
      %p114 = scmp.eq.s32.totalorder %s25, 0
      %p115 = por %p113, %p114
      %s116 = ssub.s32 %s26, %s38
      %s117 = ssub.s32 %s27, %s34
      %s118 = sor.u32 %s116, %s117
      %p119 = scmp.eq.s32.totalorder %s118, 0
      %s121 = sadd.s32 %s120, 1
      %s122 = scalar_select %p119, %s120, %s121
      %p125 = pneg %p119
      %p126 = scmp.eq.s32.totalorder %s19, 1
      %p127 = por %p125, %p126
      %p128 = scmp.ne.s32.totalorder %s120, %s123
      %p129 = scmp.eq.s32.totalorder %s19, 0
      %p130 = por %p128, %p129
      %p131 = scmp.ne.s32.totalorder %s120, %s123
      %p132 = scmp.eq.s32.totalorder %s24, 1
      %p133 = por %p131, %p132
      %p134 = scmp.ne.s32.totalorder %s123, %s124
      %p135 = scmp.eq.s32.totalorder %s24, 0
      %p136 = por %p134, %p135
      %p137 = scmp.ne.s32.totalorder %s123, %s124
      %p138 = scmp.eq.s32.totalorder %s25, 1
      %p139 = por %p137, %p138
      %p141 = scmp.ne.s32.totalorder %s124, %s140
      %p142 = scmp.eq.s32.totalorder %s25, 0
      %p143 = por %p141, %p142
      %p144 = scmp.le.s32.totalorder 1, %s19
      %p145 = scmp.lt.s32.totalorder %s19, 3
      %p146 = pnand %p144, %p145
      %p147 = pneg %p146
      // Predicated region
      $region9: #{tpu_custom_call.1} parent=5 // pred_check
        _
      $region10: #{tpu_custom_call.1} parent=5 // pred_check_branch
        %149 = sbr.rel (%p146) target = $region12
      $region11: #{tpu_custom_call.1} parent=5 // pred_region
        %s150 = ssub.s32 %s19, 1
        // Predicated region
        $region13: #{tpu_custom_call.1} parent=11 // pred_check
          %p151 = pneg %p108
        $region14: #{tpu_custom_call.1} parent=11 // pred_check_branch
          %153 = sbr.rel (%p151) target = $region16
        $region15: #{tpu_custom_call.1} parent=11 // pred_region
          %s155 = ssub.s32 16, 16
          %156 = vsyncadd [#allocation5], %s155
          %s158 = sshll.u32 %s2, 4
          %s159 = int_to_ptr.vmem [resolvable:$true] %s158
          %161 = dma.vmem_to_smem %s159, 16, [#allocation8], [#allocation5]
        $region16: #{tpu_custom_call.1} parent=11 // pred_fallthru
          _
      $region12: #{tpu_custom_call.1} parent=5 // pred_fallthru
        _
      %p162 = scmp.lt.s32.totalorder %s19, 2
      // Predicated region
      $region17: #{tpu_custom_call.1} parent=5 // pred_check
        %p163 = pneg %p162
      $region18: #{tpu_custom_call.1} parent=5 // pred_check_branch
        %165 = sbr.rel (%p163) target = $region20
      $region19: #{tpu_custom_call.1} parent=5 // pred_region
        // Predicated region
        $region21: #{tpu_custom_call.1} parent=19 // pred_check
          %p166 = pneg %p53
        $region22: #{tpu_custom_call.1} parent=19 // pred_check_branch
          %168 = sbr.rel (%p166) target = $region24
        $region23: #{tpu_custom_call.1} parent=19 // pred_region
          #allocation11 [shape = 'u32[6]{0}', space=smem, size = 0x18, scoped, tag = 'DMA stride descriptor']
          %s169 = sand.u32 %s43, 1
          %s170 = scalar_lea.sflag [#allocation3], %s169
          %s171 = sand.u32 %s43, 1
          %s172 = smul.addr %s171, 32
          %s173 = scalar_lea.vmem [#allocation2], %s172
          %s174 = smul.u32 4, %s27
          %s175 = ssub.s32 1, %s174
          %s176 = smul.u32 128, %s175
          %s178 = ssub.s32 512, %s176
          %179 = vsyncadd %s170, %s178
          %p180 = scmp.ne.s32.totalorder 0, %s176
          %s181 = smul.addr %s26, 4
          %s182 = sadd.s32 %s174, %s181
          %s183 = smul.addr %s182, 32
          %s184 = scalar_lea.hbm %s0, %s183
          %s185 = smul.u32 2, %s175
          %s186 = smul.u32 %s185, 4
          %s188 = sshll.u32 1, 14
          %s189 = sxor.u32 4294967295, %s188
          %s191 = sld [smem:[#allocation0]]
          %s192 = sadd.s32 2, %s191
          %s194 = sshll.u32 7, 26
          %s195 = sxor.u32 4294967295, %s194
          %s196 = sand.u32 0, %s195
          %s197 = sshll.u32 %s192, 26
          %s198 = sor.u32 %s196, %s197
          %s199 = sshll.u32 %s173, 4
          %s200 = int_to_ptr.vmem [resolvable:$true] %s199
          %s201 = sshll.u32 %s186, 4
          %206 = sst [smem:[#allocation11]] 32
          %s207 = scalar_lea.smem [#allocation11], 1
          %208 = sst [smem:[%s207]] 128
          %s209 = scalar_lea.smem [#allocation11], 2
          %210 = sst [smem:[%s209]] %s175
          %s211 = scalar_lea.smem [#allocation11], 3
          %212 = sst [smem:[%s211]] 32
          %s213 = scalar_lea.smem [#allocation11], 4
          %214 = sst [smem:[%s213]] 32
          %s215 = scalar_lea.smem [#allocation11], 5
          %216 = sst [smem:[%s215]] 2
          %218 = dma.general (%p180), %s184, %s201, %s200, %s170, [#allocation10], [#allocation11], %s198, 0
        $region24: #{tpu_custom_call.1} parent=19 // pred_fallthru
          _
        // Predicated region
        $region25: #{tpu_custom_call.1} parent=19 // pred_check
          %p219 = pneg %p81
        $region26: #{tpu_custom_call.1} parent=19 // pred_check_branch
          %221 = sbr.rel (%p219) target = $region28
        $region27: #{tpu_custom_call.1} parent=19 // pred_region
          %s222 = sand.u32 %s71, 1
          %s223 = scalar_lea.sflag [#allocation7], %s222
          %s224 = sand.u32 %s71, 1
          %s225 = smul.addr %s224, 8
          %s226 = scalar_lea.vmem [#allocation6], %s225
          %s227 = smul.u32 4, %s27
          %s228 = ssub.s32 1, %s227
          %s229 = smul.u32 32, %s228
          %s231 = ssub.s32 128, %s229
          %232 = vsyncadd %s223, %s231
          %p233 = scmp.ne.s32.totalorder 0, %s229
          %s234 = sadd.s32 %s227, %s26
          %s235 = smul.addr %s234, 32
          %s236 = scalar_lea.hbm %s1, %s235
          %s237 = smul.u32 2, %s228
          %s238 = sshll.u32 %s226, 4
          %s239 = int_to_ptr.vmem [resolvable:$true] %s238
          %s240 = sshll.u32 %s237, 4
          %244 = dma.hbm_to_vmem [thread:$0]  (%p233), %s236, %s240, %s239, %s223, 32, 32, 2
        $region28: #{tpu_custom_call.1} parent=19 // pred_fallthru
          _
      $region20: #{tpu_custom_call.1} parent=5 // pred_fallthru
        _
      %p245 = scmp.le.s32.totalorder 1, %s19
      %p246 = scmp.lt.s32.totalorder %s19, 3
      %p247 = pnand %p245, %p246
      %p248 = pneg %p247
      // Predicated region
      $region29: #{tpu_custom_call.1} parent=5 // pred_check
        _
      $region30: #{tpu_custom_call.1} parent=5 // pred_check_branch
        %250 = sbr.rel (%p247) target = $region32
      $region31: #{tpu_custom_call.1} parent=5 // pred_region
        %s251 = ssub.s32 %s19, 1
        %s252 = sand.u32 %s46, 1
        %s253 = scalar_lea.sflag [#allocation3], %s252
        %s254 = sand.u32 %s46, 1
        %s255 = smul.addr %s254, 32
        %s256 = scalar_lea.vmem [#allocation2], %s255
        // Predicated region
        $region33: #{tpu_custom_call.1} parent=31 // pred_check
          %p257 = pneg %p59
        $region34: #{tpu_custom_call.1} parent=31 // pred_check_branch
          %259 = sbr.rel (%p257) target = $region36
        $region35: #{tpu_custom_call.1} parent=31 // pred_region
          %260 = dma.done %s253, 512
        $region36: #{tpu_custom_call.1} parent=31 // pred_fallthru
          _
        %s261 = sand.u32 %s74, 1
        %s262 = scalar_lea.sflag [#allocation7], %s261
        %s263 = sand.u32 %s74, 1
        %s264 = smul.addr %s263, 8
        %s265 = scalar_lea.vmem [#allocation6], %s264
        // Predicated region
        $region37: #{tpu_custom_call.1} parent=31 // pred_check
          %p266 = pneg %p87
        $region38: #{tpu_custom_call.1} parent=31 // pred_check_branch
          %268 = sbr.rel (%p266) target = $region40
        $region39: #{tpu_custom_call.1} parent=31 // pred_region
          %269 = dma.done %s262, 128
        $region40: #{tpu_custom_call.1} parent=31 // pred_fallthru
          _
        // Predicated region
        $region41: #{tpu_custom_call.1} parent=31 // pred_check
          %p270 = pneg %p108
        $region42: #{tpu_custom_call.1} parent=31 // pred_check_branch
          %272 = sbr.rel (%p270) target = $region44
        $region43: #{tpu_custom_call.1} parent=31 // pred_region
          %273 = dma.done [#allocation5], 16
        $region44: #{tpu_custom_call.1} parent=31 // pred_fallthru
          _
        %274 = sfence
        %s275 = sand.u32 %s46, 1
        %s276 = scalar_lea.sflag [#allocation3], %s275
        %s277 = sand.u32 %s46, 1
        %s278 = smul.addr %s277, 32
        %s279 = scalar_lea.vmem [#allocation2], %s278
        %p280 = pneg %p59
        %p281 = pneg %p56
        %s282 = sand.u32 %s74, 1
        %s283 = scalar_lea.sflag [#allocation7], %s282
        %s284 = sand.u32 %s74, 1
        %s285 = smul.addr %s284, 8
        %s286 = scalar_lea.vmem [#allocation6], %s285
        %p287 = pneg %p87
        %p288 = pneg %p84
        %p289 = pneg %p108
        %p290 = pneg %p105
        %p291 = pneg %p136
        %p292 = pneg %p133
        %s293 = sand.u32 %s123, 1
        %s294 = scalar_lea.sflag [#allocation4], %s293
        %s295 = sand.u32 %s123, 1
        %s296 = scalar_lea.vmem [#allocation9], %s295
        %s297 = smul.u32 4, %s29
        %s298 = ssub.s32 1, %s297
        %s299 = smul.u32 128, %s298
        %s300 = smul.u32 4, %s29
        %s301 = ssub.s32 1, %s300
        %s302 = smul.u32 32, %s301
        %v303 = vld [vmem:[%s265] sm:$0xff]
        %v304 = vld [vmem:[%s256] sm:$0xff]
        %s305 = scalar_lea.vmem %s256, 8 [#allocation2]
        %v306 = vld [vmem:[%s305] sm:$0xff]
        %v307 = vmax.f32 %v304, %v306
        %s308 = scalar_lea.vmem %s256, 16 [#allocation2]
        %v309 = vld [vmem:[%s308] sm:$0xff]
        %v310 = vmax.f32 %v307, %v309
        %s311 = scalar_lea.vmem %s256, 24 [#allocation2]
        %v312 = vld [vmem:[%s311] sm:$0xff]
        %v313 = vmax.f32 %v310, %v312
        %v314 = vsub.f32 %v304, %v313
        %v315 = vmul.f32 %v314, 1.442695
        %v316 = vpow.pop %v315
        %v317 = vadd.f32 %v316, 0.0
        %vm318 = vcmp.eq.s32.totalorder %v303, 0
        %v319 = vsel %vm318, %v314, 0.0
        %s320 = sld [smem:[#allocation8]]
        %v321 = vstv %s320
        %v322 = vsel %vm318, %v321, 0.0
        %v323 = vsub.f32 %v306, %v313
        %v324 = vmul.f32 %v323, 1.442695
        %v325 = vpow.pop %v324
        %v326 = vadd.f32 %v317, %v325
        %vm327 = vcmp.eq.s32.totalorder %v303, 1
        %v328 = vsel %vm327, %v323, %v319
        %s329 = sld [smem:[#allocation8 + $0x1]]
        %v330 = vstv %s329
        %v331 = vsel %vm327, %v330, %v322
        %v332 = vsub.f32 %v309, %v313
        %v333 = vmul.f32 %v332, 1.442695
        %v334 = vpow.pop %v333
        %v335 = vadd.f32 %v326, %v334
        %vm336 = vcmp.eq.s32.totalorder %v303, 2
        %v337 = vsel %vm336, %v332, %v328
        %s338 = sld [smem:[#allocation8 + $0x2]]
        %v339 = vstv %s338
        %v340 = vsel %vm336, %v339, %v331
        %v341 = vsub.f32 %v312, %v313
        %v342 = vmul.f32 %v341, 1.442695
        %v343 = vpow.pop %v342
        %v344 = vadd.f32 %v335, %v343
        %vm345 = vcmp.eq.s32.totalorder %v303, 3
        %v346 = vsel %vm345, %v341, %v337
        %s347 = sld [smem:[#allocation8 + $0x3]]
        %v348 = vstv %s347
        %v349 = vsel %vm345, %v348, %v340
        %v350 = vlog2.pop %v344
        %v351 = vmul.f32 %v350, 0.6931472
        %v352 = vsub.f32 %v346, %v351
        %v353 = vmul.f32 %v352, %v349
        %v354 = vmul.f32 %v352, 1.442695
        %v355 = vpow.pop %v354
        %v356 = vsub.f32 1.0, %v355
        %v357 = vmax.f32 %v356, 0.0
        %v358 = vmul.f32 %v357, %v357
        %v359 = vsub.f32 0.0, %v358
        %v360 = vmul.f32 %v359, %v353
        %361 = vadd.xlane.f32.xlu0 %v360
        %v362 = vpop.xlane.xlu0 %361
        %v363 = vrot.slane %v362, 4
        %v364 = vadd.f32 %v362, %v363
        %v365 = vrot.slane %v364, 2
        %v366 = vadd.f32 %v364, %v365
        %v367 = vrot.slane %v366, 1
        %v368 = vadd.f32 %v366, %v367
        %s369 = vtos %v368
        %v370 = vstv %s369
        %371 = vst [vmem:[%s296] sm:$0x1] %v370
        %p372 = scmp.eq.s32.totalorder %s29, 0
        // Predicated region
        $region45: #{tpu_custom_call.1} parent=31 // pred_check
          %p373 = pneg %p372
        $region46: #{tpu_custom_call.1} parent=31 // pred_check_branch
          %375 = sbr.rel (%p373) target = $region48
        $region47: #{tpu_custom_call.1} parent=31 // pred_region
          %s376 = smul.u32 %s29, 8
          %v377 = vlaneseq
          %v378 = vshrl.u32 %v377, 7
          %v379 = vstv %s376
          %v380 = vadd.s32 %v379, %v378
          %vm381 = vcmp.lt.s32.totalorder %v380, 2
          %v382 = vsel %vm381, %v360, 0.0
          %383 = vadd.xlane.f32.xlu0 %v382
          %v384 = vpop.xlane.xlu0 %383
          %v385 = vrot.slane %v384, 4
          %v386 = vadd.f32 %v384, %v385
          %v387 = vrot.slane %v386, 2
          %v388 = vadd.f32 %v386, %v387
          %v389 = vrot.slane %v388, 1
          %v390 = vadd.f32 %v388, %v389
          %s391 = vtos %v390
          %v392 = vstv %s391
          %393 = vst [vmem:[%s296] sm:$0x1] %v392
        $region48: #{tpu_custom_call.1} parent=31 // pred_fallthru
          _
        %s394 = sand.u32 %s123, 1
        %s395 = scalar_lea.sflag [#allocation4], %s394
        %s396 = sand.u32 %s123, 1
        %s397 = scalar_lea.vmem [#allocation9], %s396
        // Predicated region
        $region49: #{tpu_custom_call.1} parent=31 // pred_check
          %p398 = pneg %p133
        $region50: #{tpu_custom_call.1} parent=31 // pred_check_branch
          %400 = sbr.rel (%p398) target = $region52
        $region51: #{tpu_custom_call.1} parent=31 // pred_region
          %s402 = ssub.s32 16, 16
          %403 = vsyncadd %s395, %s402
          %s404 = sadd.s32 %s29, %s28
          %s405 = smul.addr %s404, 16
          %s406 = scalar_lea.hbm %s3, %s405
          %s408 = sshll.u32 %s397, 4
          %s409 = int_to_ptr.vmem [resolvable:$true] %s408
          %411 = dma.vmem_to_hbm [thread:$0]  %s409, 16, %s406, %s395
        $region52: #{tpu_custom_call.1} parent=31 // pred_fallthru
          _
      $region32: #{tpu_custom_call.1} parent=5 // pred_fallthru
        _
      %p412 = scmp.le.s32.totalorder 2, %s19
      // Predicated region
      $region53: #{tpu_custom_call.1} parent=5 // pred_check
        %p413 = pneg %p412
      $region54: #{tpu_custom_call.1} parent=5 // pred_check_branch
        %415 = sbr.rel (%p413) target = $region56
      $region55: #{tpu_custom_call.1} parent=5 // pred_region
        %s416 = ssub.s32 %s19, 2
        // Predicated region
        $region57: #{tpu_custom_call.1} parent=55 // pred_check
          %p417 = pneg %p139
        $region58: #{tpu_custom_call.1} parent=55 // pred_check_branch
          %419 = sbr.rel (%p417) target = $region60
        $region59: #{tpu_custom_call.1} parent=55 // pred_region
          %s420 = sand.u32 %s124, 1
          %s421 = scalar_lea.sflag [#allocation4], %s420
          %s422 = sand.u32 %s124, 1
          %s423 = scalar_lea.vmem [#allocation9], %s422
          %424 = dma.done %s421, 16
        $region60: #{tpu_custom_call.1} parent=55 // pred_fallthru
          _
      $region56: #{tpu_custom_call.1} parent=5 // pred_fallthru
        _
    $region6: #{tpu_custom_call.1} parent=1 // loop_footer
      %s23 = sadd.s32 1, %s19
    $region7: #{tpu_custom_call.1} parent=1 // loop_footer_branch
      %18 = sbr.rel target = $region3
    $region8: #{tpu_custom_call.1} parent=1 // loop_exit
      _
    %425 = vsyncpa [#allocation3], 1
    %s426 = scalar_lea.sflag [#allocation3], 1
    %427 = vsyncpa %s426, 1
    %428 = vsyncpa [#allocation7], 1
    %s429 = scalar_lea.sflag [#allocation7], 1
    %430 = vsyncpa %s429, 1
    %431 = vsyncpa [#allocation4], 1
    %s432 = scalar_lea.sflag [#allocation4], 1
    %433 = vsyncpa %s432, 1
    %434 = vsyncpa [#allocation5], 1
    %s435 = scalar_lea.sflag [#allocation5], 1
    %436 = vsyncpa %s435, 1

</llo_original>
